<compile_context>
chip_gen: v5e
topology: v5e:2x2
jax: 0.10.0
libtpu: 0.0.40
codegen_flags: <defaults>
</compile_context>

<pallas_src>
import functools

import jax
import jax.numpy as jnp
from jax.experimental import pallas as pl
from jax.experimental.pallas import tpu as pltpu

LANE = 128  # pad all channel dims to this for lane-dense layout


def fused_embed_kernel(x_ref, w_ref, b_ref, o_ref):
    # x_ref: (nb, L, 128) f32      nb batch elements, channels zero-padded
    # w_ref: (3, K*128, 128) bf16  per-layer im2col weights, BN scale folded
    # b_ref: (3, 1, 128) f32       per-layer folded BN shift (incl. conv bias)
    # o_ref: (nb, L-6, 128) f32    lane-dense output (real channels in [:64])
    nb = x_ref.shape[0]
    c = x_ref.shape[-1]
    n_layers = w_ref.shape[0]

    h = [x_ref[b] for b in range(nb)]              # nb x (L, c) f32
    for layer in range(n_layers):                  # static unroll: 3 layers
        w2d = w_ref[layer]                         # (K*c, c) bf16
        shift = b_ref[layer]                       # (1, c) f32
        k = w2d.shape[0] // c                      # taps from shapes
        l_out = h[0].shape[0] - k + 1
        # im2col per batch element, stacked along sublanes -> ONE MXU matmul
        # per layer regardless of nb.  Lane concat offsets are 128-aligned.
        xi = jnp.concatenate(
            [jnp.concatenate([hb[t:t + l_out, :] for t in range(k)], axis=-1)
             for hb in h],
            axis=0)                                # (nb*l_out, K*c) f32
        y = jnp.dot(xi.astype(w2d.dtype), w2d,
                    preferred_element_type=jnp.float32)
        y = jnp.maximum(y + shift, 0.0)            # shift/ReLU kept in f32
        h = [y[b * l_out:(b + 1) * l_out, :] for b in range(nb)]

    for b in range(nb):
        o_ref[b] = h[b].astype(o_ref.dtype)


def _batch_grid_steps(n):
    """Per-batch grid only on multi-TensorCore chips (v7x); else one step."""
    try:
        kind = jax.devices()[0].device_kind.lower()
    except Exception:
        kind = ""
    multi_tc = ("v7" in kind) or ("7x" in kind)
    steps = n if (multi_tc and n > 1) else 1
    if n % steps != 0:
        steps = 1
    return steps


@functools.partial(jax.jit, static_argnames=("c_out_final",))
def embedding_forward(x_ncl, ws, bs, *, c_out_final=64):
    """x_ncl: (N, C_in, L) f32 (PyTorch Conv1d layout);
    ws: (3, K*128, 128) bf16; bs: (3, 1, 128) f32."""
    n, c_in, l = x_ncl.shape
    n_layers, kc, c_pad = ws.shape
    # all layers must share the same 128-lane pad (k is derived from it)
    assert c_pad == LANE and kc % LANE == 0, (kc, c_pad)
    assert c_in <= LANE
    k = kc // LANE
    l_out = l - n_layers * (k - 1)

    # NCL -> NLC, lane-pad input channels to 128 (pad lanes have zero weights)
    x_nlc = jnp.transpose(x_ncl, (0, 2, 1))
    x_pad = jnp.zeros((n, l, LANE), jnp.float32).at[:, :, :c_in].set(x_nlc)

    steps = _batch_grid_steps(n)      # N on v7x (one batch elem per TC), else 1
    nb = n // steps

    out = pl.pallas_call(
        fused_embed_kernel,
        out_shape=jax.ShapeDtypeStruct((n, l_out, c_pad), jnp.float32),
        grid=(steps,),
        in_specs=[
            pl.BlockSpec((nb, l, LANE), lambda i: (i, 0, 0)),
            pl.BlockSpec(ws.shape, lambda i: (0, 0, 0)),
            pl.BlockSpec(bs.shape, lambda i: (0, 0, 0)),
        ],
        out_specs=pl.BlockSpec((nb, l_out, c_pad), lambda i: (i, 0, 0)),
        compiler_params=pltpu.CompilerParams(
            dimension_semantics=("parallel",)),    # shards over 2 TCs on v7x
    )(x_pad, ws, bs)
    return out[:, :, :c_out_final]                 # drop lane padding


def make_layer_params(key, c_in, c_out, c_pad=LANE, eps=1e-5):
    """Deterministic Conv1d + BatchNorm1d(eval) params; BN folded, lane-padded.
    Folded im2col weights are returned in bf16, shift stays f32."""
    k_w, k_b, k_g, k_be, k_m, k_v = jax.random.split(key, 6)
    # conv weight in (K, Cin, Cout) layout (PyTorch is (Cout, Cin, K))
    w = jax.random.normal(k_w, (3, c_in, c_out), jnp.float32) * 0.1
    b = jax.random.normal(k_b, (c_out,), jnp.float32) * 0.1
    gamma = 1.0 + 0.1 * jax.random.normal(k_g, (c_out,), jnp.float32)
    beta = 0.1 * jax.random.normal(k_be, (c_out,), jnp.float32)
    mean = 0.1 * jax.random.normal(k_m, (c_out,), jnp.float32)
    var = jax.nn.softplus(jax.random.normal(k_v, (c_out,), jnp.float32)) + 0.5

    # fold: bn(conv(x)+b) = conv(x, w*scale) + ((b - mean)*scale + beta)
    scale = gamma / jnp.sqrt(var + eps)
    w_fold = w * scale[None, None, :]
    shift = (b - mean) * scale + beta

    # pad to lane-dense im2col layout: rows = tap*c_pad + cin, cols = cout
    w_pad = jnp.zeros((3, c_pad, c_pad), jnp.float32).at[:, :c_in, :c_out].set(w_fold)
    w2d = w_pad.reshape(3 * c_pad, c_pad).astype(jnp.bfloat16)   # halve DMA
    shift_pad = jnp.zeros((1, c_pad), jnp.float32).at[0, :c_out].set(shift)
    raw = (w, b, gamma, beta, mean, var, eps)
    return w2d, shift_pad, raw


def _ref_forward(x_nlc, raw_params):
    """Pure-JAX f32 reference: un-folded conv + BatchNorm1d(eval) + ReLU."""
    out = x_nlc
    for (w, b, gamma, beta, mean, var, eps) in raw_params:
        k = w.shape[0]
        l_out = out.shape[1] - k + 1
        y = sum(jnp.einsum("nlc,cd->nld", out[:, t:t + l_out, :], w[t])
                for t in range(k)) + b
        y = (y - mean) * (gamma / jnp.sqrt(var + eps)) + beta
        out = jnp.maximum(y, 0.0)
    return out


if __name__ == "__main__":
    key = jax.random.PRNGKey(0)
    k_x, k1, k2, k3 = jax.random.split(key, 4)

    N, C_IN, L = 2, 2, 16                       # PyTorch input is (2, 2, 16) NCL
    x_ncl = jax.random.normal(k_x, (N, C_IN, L), jnp.float32)

    w1, b1, r1 = make_layer_params(k1, 2, 16)
    w2, b2, r2 = make_layer_params(k2, 16, 32)
    w3, b3, r3 = make_layer_params(k3, 32, 64)
    ws = jnp.stack([w1, w2, w3])                # (3, 384, 128) bf16
    bs = jnp.stack([b1, b2, b3])                # (3, 1, 128) f32

    out = embedding_forward(x_ncl, ws, bs, c_out_final=64)
    out = jax.block_until_ready(out)

    assert out.shape == (N, L - 6, 64), out.shape
    ref = _ref_forward(jnp.transpose(x_ncl, (0, 2, 1)), [r1, r2, r3])
    err = float(jnp.max(jnp.abs(out - ref)))
    # bf16 folded weights vs f32 reference -> loosened tolerance
    assert err < 5e-2, err

    print("KERNEL_OK")
</pallas_src>

<mosaic_0001>
module attributes {stable_mosaic.version = 11 : i64} {
  func.func @fused_embed_kernel(%arg0: i32, %arg1: memref<2x16x128xf32, #tpu.memory_space<vmem>>, %arg2: memref<3x384x128xbf16, #tpu.memory_space<vmem>>, %arg3: memref<3x1x128xf32, #tpu.memory_space<vmem>>, %arg4: memref<2x10x128xf32, #tpu.memory_space<vmem>>) attributes {dimension_semantics = [#tpu.dimension_semantics<parallel>], iteration_bounds = array<i64: 1>, scalar_prefetch = 0 : i64, scratch_operands = 0 : i64, tpu.core_type = #tpu.core_type<tc>, window_params = [{transform_indices = @transform_0, window_bounds = array<i64: 2, 16, 128>}, {pipeline_mode = #tpu.pipeline_mode<synchronous>, transform_indices = @transform_1, window_bounds = array<i64: 3, 384, 128>}, {pipeline_mode = #tpu.pipeline_mode<synchronous>, transform_indices = @transform_2, window_bounds = array<i64: 3, 1, 128>}, {transform_indices = @transform_3, window_bounds = array<i64: 2, 10, 128>}]} {
    %c0 = arith.constant 0 : index
    %c0_0 = arith.constant 0 : index
    %c0_1 = arith.constant 0 : index
    %0 = vector.load %arg1[%c0, %c0_0, %c0_1] : memref<2x16x128xf32, #tpu.memory_space<vmem>>, vector<1x16x128xf32>
    %1 = vector.shape_cast %0 : vector<1x16x128xf32> to vector<16x128xf32>
    %c1 = arith.constant 1 : index
    %c0_2 = arith.constant 0 : index
    %c0_3 = arith.constant 0 : index
    %2 = vector.load %arg1[%c1, %c0_2, %c0_3] : memref<2x16x128xf32, #tpu.memory_space<vmem>>, vector<1x16x128xf32>
    %3 = vector.shape_cast %2 : vector<1x16x128xf32> to vector<16x128xf32>
    %c0_4 = arith.constant 0 : index
    %c0_5 = arith.constant 0 : index
    %c0_6 = arith.constant 0 : index
    %4 = vector.load %arg2[%c0_4, %c0_5, %c0_6] : memref<3x384x128xbf16, #tpu.memory_space<vmem>>, vector<1x384x128xbf16>
    %5 = vector.shape_cast %4 : vector<1x384x128xbf16> to vector<384x128xbf16>
    %c0_7 = arith.constant 0 : index
    %c0_8 = arith.constant 0 : index
    %c0_9 = arith.constant 0 : index
    %6 = vector.load %arg3[%c0_7, %c0_8, %c0_9] : memref<3x1x128xf32, #tpu.memory_space<vmem>>, vector<1x1x128xf32>
    %7 = vector.shape_cast %6 : vector<1x1x128xf32> to vector<1x128xf32>
    %8 = vector.extract_strided_slice %1 {offsets = [0, 0], sizes = [14, 128], strides = [1, 1]} : vector<16x128xf32> to vector<14x128xf32>
    %9 = vector.extract_strided_slice %1 {offsets = [1, 0], sizes = [14, 128], strides = [1, 1]} : vector<16x128xf32> to vector<14x128xf32>
    %10 = vector.extract_strided_slice %1 {offsets = [2, 0], sizes = [14, 128], strides = [1, 1]} : vector<16x128xf32> to vector<14x128xf32>
    %11 = tpu.concatenate %8, %9, %10 in 1 : vector<14x128xf32>, vector<14x128xf32>, vector<14x128xf32> -> vector<14x384xf32>
    %12 = vector.extract_strided_slice %3 {offsets = [0, 0], sizes = [14, 128], strides = [1, 1]} : vector<16x128xf32> to vector<14x128xf32>
    %13 = vector.extract_strided_slice %3 {offsets = [1, 0], sizes = [14, 128], strides = [1, 1]} : vector<16x128xf32> to vector<14x128xf32>
    %14 = vector.extract_strided_slice %3 {offsets = [2, 0], sizes = [14, 128], strides = [1, 1]} : vector<16x128xf32> to vector<14x128xf32>
    %15 = tpu.concatenate %12, %13, %14 in 1 : vector<14x128xf32>, vector<14x128xf32>, vector<14x128xf32> -> vector<14x384xf32>
    %16 = tpu.concatenate %11, %15 in 0 : vector<14x384xf32>, vector<14x384xf32> -> vector<28x384xf32>
    %17 = arith.truncf %16 : vector<28x384xf32> to vector<28x384xbf16>
    %cst = arith.constant dense<0.000000e+00> : vector<28x128xf32>
    %18 = tpu.matmul %17, %5, %cst {dimension_numbers = #tpu.dot_dimension_numbers<[1], [0], [0], [1], [0, 0, 1, 1], [], []>} : vector<28x384xbf16>, vector<384x128xbf16>, vector<28x128xf32> -> vector<28x128xf32>
    %19 = vector.broadcast %7 : vector<1x128xf32> to vector<28x128xf32>
    %20 = arith.addf %18, %19 : vector<28x128xf32>
    %cst_10 = arith.constant 0.000000e+00 : f32
    %21 = vector.broadcast %cst_10 : f32 to vector<28x128xf32>
    %22 = arith.maximumf %20, %21 : vector<28x128xf32>
    %23 = vector.extract_strided_slice %22 {offsets = [0, 0], sizes = [14, 128], strides = [1, 1]} : vector<28x128xf32> to vector<14x128xf32>
    %24 = vector.extract_strided_slice %22 {offsets = [14, 0], sizes = [14, 128], strides = [1, 1]} : vector<28x128xf32> to vector<14x128xf32>
    %c1_11 = arith.constant 1 : index
    %c0_12 = arith.constant 0 : index
    %c0_13 = arith.constant 0 : index
    %25 = vector.load %arg2[%c1_11, %c0_12, %c0_13] : memref<3x384x128xbf16, #tpu.memory_space<vmem>>, vector<1x384x128xbf16>
    %26 = vector.shape_cast %25 : vector<1x384x128xbf16> to vector<384x128xbf16>
    %c1_14 = arith.constant 1 : index
    %c0_15 = arith.constant 0 : index
    %c0_16 = arith.constant 0 : index
    %27 = vector.load %arg3[%c1_14, %c0_15, %c0_16] : memref<3x1x128xf32, #tpu.memory_space<vmem>>, vector<1x1x128xf32>
    %28 = vector.shape_cast %27 : vector<1x1x128xf32> to vector<1x128xf32>
    %29 = vector.extract_strided_slice %23 {offsets = [0, 0], sizes = [12, 128], strides = [1, 1]} : vector<14x128xf32> to vector<12x128xf32>
    %30 = vector.extract_strided_slice %23 {offsets = [1, 0], sizes = [12, 128], strides = [1, 1]} : vector<14x128xf32> to vector<12x128xf32>
    %31 = vector.extract_strided_slice %23 {offsets = [2, 0], sizes = [12, 128], strides = [1, 1]} : vector<14x128xf32> to vector<12x128xf32>
    %32 = tpu.concatenate %29, %30, %31 in 1 : vector<12x128xf32>, vector<12x128xf32>, vector<12x128xf32> -> vector<12x384xf32>
    %33 = vector.extract_strided_slice %24 {offsets = [0, 0], sizes = [12, 128], strides = [1, 1]} : vector<14x128xf32> to vector<12x128xf32>
    %34 = vector.extract_strided_slice %24 {offsets = [1, 0], sizes = [12, 128], strides = [1, 1]} : vector<14x128xf32> to vector<12x128xf32>
    %35 = vector.extract_strided_slice %24 {offsets = [2, 0], sizes = [12, 128], strides = [1, 1]} : vector<14x128xf32> to vector<12x128xf32>
    %36 = tpu.concatenate %33, %34, %35 in 1 : vector<12x128xf32>, vector<12x128xf32>, vector<12x128xf32> -> vector<12x384xf32>
    %37 = tpu.concatenate %32, %36 in 0 : vector<12x384xf32>, vector<12x384xf32> -> vector<24x384xf32>
    %38 = arith.truncf %37 : vector<24x384xf32> to vector<24x384xbf16>
    %cst_17 = arith.constant dense<0.000000e+00> : vector<24x128xf32>
    %39 = tpu.matmul %38, %26, %cst_17 {dimension_numbers = #tpu.dot_dimension_numbers<[1], [0], [0], [1], [0, 0, 1, 1], [], []>} : vector<24x384xbf16>, vector<384x128xbf16>, vector<24x128xf32> -> vector<24x128xf32>
    %40 = vector.broadcast %28 : vector<1x128xf32> to vector<24x128xf32>
    %41 = arith.addf %39, %40 : vector<24x128xf32>
    %cst_18 = arith.constant 0.000000e+00 : f32
    %42 = vector.broadcast %cst_18 : f32 to vector<24x128xf32>
    %43 = arith.maximumf %41, %42 : vector<24x128xf32>
    %44 = vector.extract_strided_slice %43 {offsets = [0, 0], sizes = [12, 128], strides = [1, 1]} : vector<24x128xf32> to vector<12x128xf32>
    %45 = vector.extract_strided_slice %43 {offsets = [12, 0], sizes = [12, 128], strides = [1, 1]} : vector<24x128xf32> to vector<12x128xf32>
    %c2 = arith.constant 2 : index
    %c0_19 = arith.constant 0 : index
    %c0_20 = arith.constant 0 : index
    %46 = vector.load %arg2[%c2, %c0_19, %c0_20] : memref<3x384x128xbf16, #tpu.memory_space<vmem>>, vector<1x384x128xbf16>
    %47 = vector.shape_cast %46 : vector<1x384x128xbf16> to vector<384x128xbf16>
    %c2_21 = arith.constant 2 : index
    %c0_22 = arith.constant 0 : index
    %c0_23 = arith.constant 0 : index
    %48 = vector.load %arg3[%c2_21, %c0_22, %c0_23] : memref<3x1x128xf32, #tpu.memory_space<vmem>>, vector<1x1x128xf32>
    %49 = vector.shape_cast %48 : vector<1x1x128xf32> to vector<1x128xf32>
    %50 = vector.extract_strided_slice %44 {offsets = [0, 0], sizes = [10, 128], strides = [1, 1]} : vector<12x128xf32> to vector<10x128xf32>
    %51 = vector.extract_strided_slice %44 {offsets = [1, 0], sizes = [10, 128], strides = [1, 1]} : vector<12x128xf32> to vector<10x128xf32>
    %52 = vector.extract_strided_slice %44 {offsets = [2, 0], sizes = [10, 128], strides = [1, 1]} : vector<12x128xf32> to vector<10x128xf32>
    %53 = tpu.concatenate %50, %51, %52 in 1 : vector<10x128xf32>, vector<10x128xf32>, vector<10x128xf32> -> vector<10x384xf32>
    %54 = vector.extract_strided_slice %45 {offsets = [0, 0], sizes = [10, 128], strides = [1, 1]} : vector<12x128xf32> to vector<10x128xf32>
    %55 = vector.extract_strided_slice %45 {offsets = [1, 0], sizes = [10, 128], strides = [1, 1]} : vector<12x128xf32> to vector<10x128xf32>
    %56 = vector.extract_strided_slice %45 {offsets = [2, 0], sizes = [10, 128], strides = [1, 1]} : vector<12x128xf32> to vector<10x128xf32>
    %57 = tpu.concatenate %54, %55, %56 in 1 : vector<10x128xf32>, vector<10x128xf32>, vector<10x128xf32> -> vector<10x384xf32>
    %58 = tpu.concatenate %53, %57 in 0 : vector<10x384xf32>, vector<10x384xf32> -> vector<20x384xf32>
    %59 = arith.truncf %58 : vector<20x384xf32> to vector<20x384xbf16>
    %cst_24 = arith.constant dense<0.000000e+00> : vector<20x128xf32>
    %60 = tpu.matmul %59, %47, %cst_24 {dimension_numbers = #tpu.dot_dimension_numbers<[1], [0], [0], [1], [0, 0, 1, 1], [], []>} : vector<20x384xbf16>, vector<384x128xbf16>, vector<20x128xf32> -> vector<20x128xf32>
    %61 = vector.broadcast %49 : vector<1x128xf32> to vector<20x128xf32>
    %62 = arith.addf %60, %61 : vector<20x128xf32>
    %cst_25 = arith.constant 0.000000e+00 : f32
    %63 = vector.broadcast %cst_25 : f32 to vector<20x128xf32>
    %64 = arith.maximumf %62, %63 : vector<20x128xf32>
    %65 = vector.extract_strided_slice %64 {offsets = [0, 0], sizes = [10, 128], strides = [1, 1]} : vector<20x128xf32> to vector<10x128xf32>
    %66 = vector.extract_strided_slice %64 {offsets = [10, 0], sizes = [10, 128], strides = [1, 1]} : vector<20x128xf32> to vector<10x128xf32>
    %c0_26 = arith.constant 0 : index
    %c0_27 = arith.constant 0 : index
    %c0_28 = arith.constant 0 : index
    %67 = vector.load %arg4[%c0_26, %c0_27, %c0_28] : memref<2x10x128xf32, #tpu.memory_space<vmem>>, vector<1x10x128xf32>
    %68 = vector.shape_cast %67 : vector<1x10x128xf32> to vector<10x128xf32>
    %69 = vector.shape_cast %65 : vector<10x128xf32> to vector<1x10x128xf32>
    tpu.vector_store %arg4[%c0_26, %c0_27, %c0_28], %69 {strides = array<i32>} : memref<2x10x128xf32, #tpu.memory_space<vmem>>, vector<1x10x128xf32>,
    %c1_29 = arith.constant 1 : index
    %c0_30 = arith.constant 0 : index
    %c0_31 = arith.constant 0 : index
    %70 = vector.load %arg4[%c1_29, %c0_30, %c0_31] : memref<2x10x128xf32, #tpu.memory_space<vmem>>, vector<1x10x128xf32>
    %71 = vector.shape_cast %70 : vector<1x10x128xf32> to vector<10x128xf32>
    %72 = vector.shape_cast %66 : vector<10x128xf32> to vector<1x10x128xf32>
    tpu.vector_store %arg4[%c1_29, %c0_30, %c0_31], %72 {strides = array<i32>} : memref<2x10x128xf32, #tpu.memory_space<vmem>>, vector<1x10x128xf32>,
    return
  }
  func.func @transform_0(%arg0: i32) -> (i32, i32, i32) {
    %c0_i32 = arith.constant 0 : i32
    %c0_i32_0 = arith.constant 0 : i32
    %c0_i32_1 = arith.constant 0 : i32
    return %arg0, %c0_i32, %c0_i32_0 : i32, i32, i32
  }
  func.func @transform_1(%arg0: i32) -> (i32, i32, i32) {
    %c0_i32 = arith.constant 0 : i32
    %c0_i32_0 = arith.constant 0 : i32
    %c0_i32_1 = arith.constant 0 : i32
    %c0_i32_2 = arith.constant 0 : i32
    return %c0_i32, %c0_i32_0, %c0_i32_1 : i32, i32, i32
  }
  func.func @transform_2(%arg0: i32) -> (i32, i32, i32) {
    %c0_i32 = arith.constant 0 : i32
    %c0_i32_0 = arith.constant 0 : i32
    %c0_i32_1 = arith.constant 0 : i32
    %c0_i32_2 = arith.constant 0 : i32
    return %c0_i32, %c0_i32_0, %c0_i32_1 : i32, i32, i32
  }
  func.func @transform_3(%arg0: i32) -> (i32, i32, i32) {
    %c0_i32 = arith.constant 0 : i32
    %c0_i32_0 = arith.constant 0 : i32
    %c0_i32_1 = arith.constant 0 : i32
    return %arg0, %c0_i32, %c0_i32_0 : i32, i32, i32
  }
}

</mosaic_0001>

<llo_original>
// kernel: embedding_forward.1
$region0: #{embedding_forward.1}
  #allocation0 [shape = 'u32[]', space=smem, size = 0x4, offset = 0x4, fixed_abs, tag = 'smem constant byte address 0x4 - core index']
  #allocation1 [shape = 'u32[72,128]{1,0:T(1,128)}', space=vmem, size = 0x9000, scoped, tag = 'internal scratch']
  %s0 = inlined_call_operand.vmem [shape: f32[2,16,128], index: 0, kind: input, shape index: {}]
  %s1 = inlined_call_operand.hbm [shape: bf16[3,384,128], index: 1, kind: input, shape index: {}]
  %s2 = inlined_call_operand.vmem [shape: f32[3,1,128], index: 2, kind: input, shape index: {}]
  %s3 = inlined_call_operand.vmem [shape: f32[2,10,128], index: 3, kind: output, shape index: {}]
  %s4 = sld [smem:[#allocation0]]
  $region26: #{embedding_forward.1} parent=0
    _
  %s6 = ssub.s32 1, %s4
  %s7 = scalar_select 0, %s6, %s4
  $region1: #{embedding_forward.1} parent=0
    #allocation2 [shape = 'u8[294912]{0}', space=vmem, size = 0x48000, scoped, tag = 'input window, operand 1, single buffered']
    #allocation3 [shape = 's32[1]{0}', space=sflag, size = 0x4, scoped, tag = 'scoped memory for embedding_forward.1']
    %8 = vsyncpa [#allocation3], 0
    // Predicated region
    $region2: #{embedding_forward.1} parent=1 // pred_check
      _
    $region3: #{embedding_forward.1} parent=1 // pred_check_branch
      %10 = sbr.rel (0) target = $region5
    $region4: #{embedding_forward.1} parent=1 // pred_region
      _
    $region5: #{embedding_forward.1} parent=1 // pred_fallthru
      _
    // Predicated region
    $region6: #{embedding_forward.1} parent=1 // pred_check
      _
    $region7: #{embedding_forward.1} parent=1 // pred_check_branch
      %12 = sbr.rel (0) target = $region9
    $region8: #{embedding_forward.1} parent=1 // pred_region
      %14 = vsyncadd [#allocation3], 0
      %s15 = sshll.u32 %s1, 4
      %s16 = int_to_ptr.hbm [resolvable:$true] %s15
      %s17 = sshll.u32 [#allocation2], 4
      %s18 = int_to_ptr.vmem [resolvable:$true] %s17
      %23 = dma.hbm_to_vmem [thread:$0]  %s16, 9216, %s18, [#allocation3], 64, 64, 4
    $region9: #{embedding_forward.1} parent=1 // pred_fallthru
      _
    // Predicated region
    $region10: #{embedding_forward.1} parent=1 // pred_check
      _
    $region11: #{embedding_forward.1} parent=1 // pred_check_branch
      %25 = sbr.rel (0) target = $region13
    $region12: #{embedding_forward.1} parent=1 // pred_region
      _
    $region13: #{embedding_forward.1} parent=1 // pred_fallthru
      _
    // Predicated region
    $region14: #{embedding_forward.1} parent=1 // pred_check
      _
    $region15: #{embedding_forward.1} parent=1 // pred_check_branch
      %27 = sbr.rel (0) target = $region17
    $region16: #{embedding_forward.1} parent=1 // pred_region
      %29 = dma.done [#allocation3], 9216
    $region17: #{embedding_forward.1} parent=1 // pred_fallthru
      _
    %v30 = vld [vmem:[%s0] sm:$0xff]
    %v31 = vld [vmem:[%s0 + $0x8] sm:$0xff]
    %s32 = scalar_lea.vmem %s0, 16
    %v33 = vld [vmem:[%s32] sm:$0xff]
    %v34 = vld [vmem:[%s32 + $0x8] sm:$0xff]
    %v35 = vld [vmem:[#allocation2] sm:$0xf]
    %v36 = vld [vmem:[#allocation2 + $0x4] sm:$0xf]
    %v37 = vld [vmem:[#allocation2 + $0x8] sm:$0xf]
    %v38 = vld [vmem:[#allocation2 + $0xc] sm:$0xf]
    %v39 = vld [vmem:[#allocation2 + $0x10] sm:$0xf]
    %v40 = vld [vmem:[#allocation2 + $0x14] sm:$0xf]
    %v41 = vld [vmem:[#allocation2 + $0x18] sm:$0xf]
    %v42 = vld [vmem:[#allocation2 + $0x1c] sm:$0xf]
    %v43 = vld [vmem:[#allocation2 + $0x20] sm:$0xf]
    %v44 = vld [vmem:[#allocation2 + $0x24] sm:$0xf]
    %v45 = vld [vmem:[#allocation2 + $0x28] sm:$0xf]
    %v46 = vld [vmem:[#allocation2 + $0x2c] sm:$0xf]
    %v47 = vld [vmem:[#allocation2 + $0x30] sm:$0xf]
    %v48 = vld [vmem:[#allocation2 + $0x34] sm:$0xf]
    %v49 = vld [vmem:[#allocation2 + $0x38] sm:$0xf]
    %v50 = vld [vmem:[#allocation2 + $0x3c] sm:$0xf]
    %v51 = vld [vmem:[#allocation2 + $0x40] sm:$0xf]
    %v52 = vld [vmem:[#allocation2 + $0x44] sm:$0xf]
    %v53 = vld [vmem:[#allocation2 + $0x48] sm:$0xf]
    %v54 = vld [vmem:[#allocation2 + $0x4c] sm:$0xf]
    %v55 = vld [vmem:[#allocation2 + $0x50] sm:$0xf]
    %v56 = vld [vmem:[#allocation2 + $0x54] sm:$0xf]
    %v57 = vld [vmem:[#allocation2 + $0x58] sm:$0xf]
    %v58 = vld [vmem:[#allocation2 + $0x5c] sm:$0xf]
    %v59 = vld [vmem:[#allocation2 + $0x60] sm:$0xf]
    %v60 = vld [vmem:[#allocation2 + $0x64] sm:$0xf]
    %v61 = vld [vmem:[#allocation2 + $0x68] sm:$0xf]
    %v62 = vld [vmem:[#allocation2 + $0x6c] sm:$0xf]
    %v63 = vld [vmem:[#allocation2 + $0x70] sm:$0xf]
    %v64 = vld [vmem:[#allocation2 + $0x74] sm:$0xf]
    %v65 = vld [vmem:[#allocation2 + $0x78] sm:$0xf]
    %v66 = vld [vmem:[#allocation2 + $0x7c] sm:$0xf]
    %v67 = vld [vmem:[#allocation2 + $0x80] sm:$0xf]
    %v68 = vld [vmem:[#allocation2 + $0x84] sm:$0xf]
    %v69 = vld [vmem:[#allocation2 + $0x88] sm:$0xf]
    %v70 = vld [vmem:[#allocation2 + $0x8c] sm:$0xf]
    %v71 = vld [vmem:[#allocation2 + $0x90] sm:$0xf]
    %v72 = vld [vmem:[#allocation2 + $0x94] sm:$0xf]
    %v73 = vld [vmem:[#allocation2 + $0x98] sm:$0xf]
    %v74 = vld [vmem:[#allocation2 + $0x9c] sm:$0xf]
    %v75 = vld [vmem:[#allocation2 + $0xa0] sm:$0xf]
    %v76 = vld [vmem:[#allocation2 + $0xa4] sm:$0xf]
    %v77 = vld [vmem:[#allocation2 + $0xa8] sm:$0xf]
    %v78 = vld [vmem:[#allocation2 + $0xac] sm:$0xf]
    %v79 = vld [vmem:[#allocation2 + $0xb0] sm:$0xf]
    %v80 = vld [vmem:[#allocation2 + $0xb4] sm:$0xf]
    %v81 = vld [vmem:[#allocation2 + $0xb8] sm:$0xf]
    %v82 = vld [vmem:[#allocation2 + $0xbc] sm:$0xf]
    %v83 = vld [vmem:[%s2] sm:$0x1]
    %vm86 = vcmask 1046528
    %v87 = vrot.slane %v30, 1
    %v88 = vrot.slane %v31, 1
    %v89 = vsel %vm86, %v87, %v88
    %vm92 = vcmask 1045504
    %v93 = vrot.slane %v30, 2
    %v94 = vrot.slane %v31, 2
    %v95 = vsel %vm92, %v93, %v94
    %v100 = vrot.slane %v33, 1
    %v101 = vrot.slane %v34, 1
    %v102 = vsel %vm86, %v100, %v101
    %v103 = vrot.slane %v33, 2
    %v104 = vrot.slane %v34, 2
    %v105 = vsel %vm92, %v103, %v104
    %v106 = vrot.slane %v102, 2
    %v107 = vrot.slane %v105, 2
    %v108 = vrot.slane %v101, 2
    %v109 = vsel %vm92, %v106, %v108
    %v110 = vrot.slane %v104, 2
    %v111 = vsel %vm92, %v107, %v110
    %v121 = vsel %vm92, %v31, %v103
    %v122 = vsel %vm92, %v88, %v106
    %v123 = vsel %vm92, %v94, %v107
    %v124 = vpack.c.bf16 %v121, %v30
    %v125 = vpack.c.bf16 %v122, %v89
    %v126 = vpack.c.bf16 %v123, %v95
    %v127 = vpack.c.bf16 %v104, %v105
    %v128 = vpack.c.bf16 %v108, %v109
    %v129 = vpack.c.bf16 %v110, %v111
    %v131 = vperm.slane %v83, 0
    %v181 = vunpack.c.l.b16 %v35
    %v182 = vunpack.c.l.b16 %v36
    %v183 = vunpack.c.l.b16 %v37
    %v184 = vunpack.c.l.b16 %v38
    %v185 = vunpack.c.l.b16 %v39
    %v186 = vunpack.c.l.b16 %v40
    %v187 = vunpack.c.l.b16 %v41
    %v188 = vunpack.c.l.b16 %v42
    %v189 = vunpack.c.l.b16 %v43
    %v190 = vunpack.c.l.b16 %v44
    %v191 = vunpack.c.l.b16 %v45
    %v192 = vunpack.c.l.b16 %v46
    %v193 = vunpack.c.l.b16 %v47
    %v194 = vunpack.c.l.b16 %v48
    %v195 = vunpack.c.l.b16 %v49
    %v196 = vunpack.c.l.b16 %v50
    %v197 = vunpack.c.l.b16 %v51
    %v198 = vunpack.c.l.b16 %v52
    %v199 = vunpack.c.l.b16 %v53
    %v200 = vunpack.c.l.b16 %v54
    %v201 = vunpack.c.l.b16 %v55
    %v202 = vunpack.c.l.b16 %v56
    %v203 = vunpack.c.l.b16 %v57
    %v204 = vunpack.c.l.b16 %v58
    %v205 = vunpack.c.l.b16 %v59
    %v206 = vunpack.c.l.b16 %v60
    %v207 = vunpack.c.l.b16 %v61
    %v208 = vunpack.c.l.b16 %v62
    %v209 = vunpack.c.l.b16 %v63
    %v210 = vunpack.c.l.b16 %v64
    %v211 = vunpack.c.l.b16 %v65
    %v212 = vunpack.c.l.b16 %v66
    %v213 = vunpack.c.l.b16 %v67
    %v214 = vunpack.c.l.b16 %v68
    %v215 = vunpack.c.l.b16 %v69
    %v216 = vunpack.c.l.b16 %v70
    %v217 = vunpack.c.l.b16 %v71
    %v218 = vunpack.c.l.b16 %v72
    %v219 = vunpack.c.l.b16 %v73
    %v220 = vunpack.c.l.b16 %v74
    %v221 = vunpack.c.l.b16 %v75
    %v222 = vunpack.c.l.b16 %v76
    %v223 = vunpack.c.l.b16 %v77
    %v224 = vunpack.c.l.b16 %v78
    %v225 = vunpack.c.l.b16 %v79
    %v226 = vunpack.c.l.b16 %v80
    %v227 = vunpack.c.l.b16 %v81
    %v228 = vunpack.c.l.b16 %v82
    %v229 = vpack.c.b16 %v182, %v181
    %v230 = vpack.c.b16 %v184, %v183
    %v231 = vpack.c.b16 %v186, %v185
    %v232 = vpack.c.b16 %v188, %v187
    %v233 = vpack.c.b16 %v190, %v189
    %v234 = vpack.c.b16 %v192, %v191
    %v235 = vpack.c.b16 %v194, %v193
    %v236 = vpack.c.b16 %v196, %v195
    %v237 = vpack.c.b16 %v198, %v197
    %v238 = vpack.c.b16 %v200, %v199
    %v239 = vpack.c.b16 %v202, %v201
    %v240 = vpack.c.b16 %v204, %v203
    %v241 = vpack.c.b16 %v206, %v205
    %v242 = vpack.c.b16 %v208, %v207
    %v243 = vpack.c.b16 %v210, %v209
    %v244 = vpack.c.b16 %v212, %v211
    %v245 = vpack.c.b16 %v214, %v213
    %v246 = vpack.c.b16 %v216, %v215
    %v247 = vpack.c.b16 %v218, %v217
    %v248 = vpack.c.b16 %v220, %v219
    %v249 = vpack.c.b16 %v222, %v221
    %v250 = vpack.c.b16 %v224, %v223
    %v251 = vpack.c.b16 %v226, %v225
    %v252 = vpack.c.b16 %v228, %v227
    %277 = vmatpush.bf16.msra.mxu0 %v236
    %278 = vmatpush.bf16.msra.mxu0 %v235
    %279 = vmatpush.bf16.msra.mxu0 %v234
    %280 = vmatpush.bf16.msra.mxu0 %v233
    %281 = vmatpush.bf16.msra.mxu0 %v232
    %282 = vmatpush.bf16.msra.mxu0 %v231
    %283 = vmatpush.bf16.msra.mxu0 %v230
    %284 = vmatpush.bf16.msra.mxu0 %v229
    %285 = vmatmul.bf16.gmra.mxu0 %v124
    %v286 = vpop.f32.mrf.mxu0
    %v287 = vadd.f32 %v131, %v286
    %v288 = vpop.f32.mrf.mxu0
    %v289 = vadd.f32 %v131, %v288
    %290 = vmatmul.bf16.gmra.mxu0 %v127
    %v291 = vpop.f32.mrf.mxu0
    %v292 = vadd.f32 %v131, %v291
    %v293 = vpop.f32.mrf.mxu0
    %v294 = vadd.f32 %v131, %v293
    %295 = vdwg.mxu0
    %296 = vmatpush.bf16.msra.mxu0 %v244
    %297 = vmatpush.bf16.msra.mxu0 %v243
    %298 = vmatpush.bf16.msra.mxu0 %v242
    %299 = vmatpush.bf16.msra.mxu0 %v241
    %300 = vmatpush.bf16.msra.mxu0 %v240
    %301 = vmatpush.bf16.msra.mxu0 %v239
    %302 = vmatpush.bf16.msra.mxu0 %v238
    %303 = vmatpush.bf16.msra.mxu0 %v237
    %304 = vmatmul.bf16.gmra.mxu0 %v125
    %v305 = vpop.f32.mrf.mxu0
    %v306 = vadd.f32 %v287, %v305
    %v307 = vpop.f32.mrf.mxu0
    %v308 = vadd.f32 %v289, %v307
    %309 = vmatmul.bf16.gmra.mxu0 %v128
    %v310 = vpop.f32.mrf.mxu0
    %v311 = vadd.f32 %v292, %v310
    %v312 = vpop.f32.mrf.mxu0
    %v313 = vadd.f32 %v294, %v312
    %314 = vdwg.mxu0
    %315 = vmatpush.bf16.msra.mxu0 %v252
    %316 = vmatpush.bf16.msra.mxu0 %v251
    %317 = vmatpush.bf16.msra.mxu0 %v250
    %318 = vmatpush.bf16.msra.mxu0 %v249
    %319 = vmatpush.bf16.msra.mxu0 %v248
    %320 = vmatpush.bf16.msra.mxu0 %v247
    %321 = vmatpush.bf16.msra.mxu0 %v246
    %322 = vmatpush.bf16.msra.mxu0 %v245
    %323 = vmatmul.bf16.gmra.mxu0 %v126
    %v324 = vpop.f32.mrf.mxu0
    %v325 = vadd.f32 %v306, %v324
    %v326 = vpop.f32.mrf.mxu0
    %v327 = vadd.f32 %v308, %v326
    %328 = vmatmul.bf16.gmra.mxu0 %v129
    %v329 = vpop.f32.mrf.mxu0
    %v330 = vadd.f32 %v311, %v329
    %v331 = vpop.f32.mrf.mxu0
    %v332 = vadd.f32 %v313, %v331
    %333 = vdwg.mxu0
    %v334 = vmax.f32 %v325, 0.0
    %v335 = vmax.f32 %v327, 0.0
    %v336 = vmax.f32 %v330, 0.0
    %v337 = vmax.f32 %v332, 0.0
    %s338 = scalar_lea.vmem [#allocation2], 192
    %v339 = vld [vmem:[%s338] sm:$0xf]
    %v340 = vld [vmem:[%s338 + $0x4] sm:$0xf]
    %v341 = vld [vmem:[%s338 + $0x8] sm:$0xf]
    %v342 = vld [vmem:[%s338 + $0xc] sm:$0xf]
    %v343 = vld [vmem:[%s338 + $0x10] sm:$0xf]
    %v344 = vld [vmem:[%s338 + $0x14] sm:$0xf]
    %v345 = vld [vmem:[%s338 + $0x18] sm:$0xf]
    %v346 = vld [vmem:[%s338 + $0x1c] sm:$0xf]
    %v347 = vld [vmem:[%s338 + $0x20] sm:$0xf]
    %v348 = vld [vmem:[%s338 + $0x24] sm:$0xf]
    %v349 = vld [vmem:[%s338 + $0x28] sm:$0xf]
    %v350 = vld [vmem:[%s338 + $0x2c] sm:$0xf]
    %v351 = vld [vmem:[%s338 + $0x30] sm:$0xf]
    %v352 = vld [vmem:[%s338 + $0x34] sm:$0xf]
    %v353 = vld [vmem:[%s338 + $0x38] sm:$0xf]
    %v354 = vld [vmem:[%s338 + $0x3c] sm:$0xf]
    %v355 = vld [vmem:[%s338 + $0x40] sm:$0xf]
    %v356 = vld [vmem:[%s338 + $0x44] sm:$0xf]
    %v357 = vld [vmem:[%s338 + $0x48] sm:$0xf]
    %v358 = vld [vmem:[%s338 + $0x4c] sm:$0xf]
    %v359 = vld [vmem:[%s338 + $0x50] sm:$0xf]
    %v360 = vld [vmem:[%s338 + $0x54] sm:$0xf]
    %v361 = vld [vmem:[%s338 + $0x58] sm:$0xf]
    %v362 = vld [vmem:[%s338 + $0x5c] sm:$0xf]
    %v363 = vld [vmem:[%s338 + $0x60] sm:$0xf]
    %v364 = vld [vmem:[%s338 + $0x64] sm:$0xf]
    %v365 = vld [vmem:[%s338 + $0x68] sm:$0xf]
    %v366 = vld [vmem:[%s338 + $0x6c] sm:$0xf]
    %v367 = vld [vmem:[%s338 + $0x70] sm:$0xf]
    %v368 = vld [vmem:[%s338 + $0x74] sm:$0xf]
    %v369 = vld [vmem:[%s338 + $0x78] sm:$0xf]
    %v370 = vld [vmem:[%s338 + $0x7c] sm:$0xf]
    %v371 = vld [vmem:[%s338 + $0x80] sm:$0xf]
    %v372 = vld [vmem:[%s338 + $0x84] sm:$0xf]
    %v373 = vld [vmem:[%s338 + $0x88] sm:$0xf]
    %v374 = vld [vmem:[%s338 + $0x8c] sm:$0xf]
    %v375 = vld [vmem:[%s338 + $0x90] sm:$0xf]
    %v376 = vld [vmem:[%s338 + $0x94] sm:$0xf]
    %v377 = vld [vmem:[%s338 + $0x98] sm:$0xf]
    %v378 = vld [vmem:[%s338 + $0x9c] sm:$0xf]
    %v379 = vld [vmem:[%s338 + $0xa0] sm:$0xf]
    %v380 = vld [vmem:[%s338 + $0xa4] sm:$0xf]
    %v381 = vld [vmem:[%s338 + $0xa8] sm:$0xf]
    %v382 = vld [vmem:[%s338 + $0xac] sm:$0xf]
    %v383 = vld [vmem:[%s338 + $0xb0] sm:$0xf]
    %v384 = vld [vmem:[%s338 + $0xb4] sm:$0xf]
    %v385 = vld [vmem:[%s338 + $0xb8] sm:$0xf]
    %v386 = vld [vmem:[%s338 + $0xbc] sm:$0xf]
    %s387 = scalar_lea.vmem %s2, 1
    %v388 = vld [vmem:[%s387] sm:$0x1]
    %v391 = vrot.slane %v334, 1
    %v392 = vrot.slane %v335, 1
    %v393 = vsel %vm86, %v391, %v392
    %v396 = vrot.slane %v334, 2
    %v397 = vrot.slane %v335, 2
    %v398 = vsel %vm92, %v396, %v397
    %v403 = vrot.slane %v336, 1
    %v404 = vsel %vm86, %v392, %v403
    %v405 = vrot.slane %v337, 1
    %v406 = vsel %vm86, %v403, %v405
    %v407 = vrot.slane %v336, 2
    %v408 = vrot.slane %v337, 2
    %v409 = vsel %vm92, %v407, %v408
    %v410 = vsel %vm92, %v397, %v407
    %v411 = vrot.slane %v404, 2
    %v412 = vrot.slane %v406, 2
    %v413 = vsel %vm92, %v411, %v412
    %v414 = vrot.slane %v407, 2
    %v415 = vrot.slane %v409, 2
    %v416 = vsel %vm92, %v414, %v415
    %v417 = vrot.slane %v405, 2
    %v418 = vsel %vm92, %v412, %v417
    %v419 = vrot.slane %v408, 2
    %v420 = vsel %vm92, %v415, %v419
    %vm427 = vcmask 1043456
    %v428 = vsel %vm427, %v335, %v410
    %v429 = vsel %vm427, %v392, %v413
    %v430 = vsel %vm427, %v397, %v416
    %v431 = vpack.c.bf16 %v428, %v334
    %v432 = vpack.c.bf16 %v429, %v393
    %v433 = vpack.c.bf16 %v430, %v398
    %v434 = vpack.c.bf16 %v409, %v409
    %v435 = vpack.c.bf16 %v418, %v418
    %v436 = vpack.c.bf16 %v420, %v420
    %v438 = vperm.slane %v388, 0
    %v488 = vunpack.c.l.b16 %v339
    %v489 = vunpack.c.l.b16 %v340
    %v490 = vunpack.c.l.b16 %v341
    %v491 = vunpack.c.l.b16 %v342
    %v492 = vunpack.c.l.b16 %v343
    %v493 = vunpack.c.l.b16 %v344
    %v494 = vunpack.c.l.b16 %v345
    %v495 = vunpack.c.l.b16 %v346
    %v496 = vunpack.c.l.b16 %v347
    %v497 = vunpack.c.l.b16 %v348
    %v498 = vunpack.c.l.b16 %v349
    %v499 = vunpack.c.l.b16 %v350
    %v500 = vunpack.c.l.b16 %v351
    %v501 = vunpack.c.l.b16 %v352
    %v502 = vunpack.c.l.b16 %v353
    %v503 = vunpack.c.l.b16 %v354
    %v504 = vunpack.c.l.b16 %v355
    %v505 = vunpack.c.l.b16 %v356
    %v506 = vunpack.c.l.b16 %v357
    %v507 = vunpack.c.l.b16 %v358
    %v508 = vunpack.c.l.b16 %v359
    %v509 = vunpack.c.l.b16 %v360
    %v510 = vunpack.c.l.b16 %v361
    %v511 = vunpack.c.l.b16 %v362
    %v512 = vunpack.c.l.b16 %v363
    %v513 = vunpack.c.l.b16 %v364
    %v514 = vunpack.c.l.b16 %v365
    %v515 = vunpack.c.l.b16 %v366
    %v516 = vunpack.c.l.b16 %v367
    %v517 = vunpack.c.l.b16 %v368
    %v518 = vunpack.c.l.b16 %v369
    %v519 = vunpack.c.l.b16 %v370
    %v520 = vunpack.c.l.b16 %v371
    %v521 = vunpack.c.l.b16 %v372
    %v522 = vunpack.c.l.b16 %v373
    %v523 = vunpack.c.l.b16 %v374
    %v524 = vunpack.c.l.b16 %v375
    %v525 = vunpack.c.l.b16 %v376
    %v526 = vunpack.c.l.b16 %v377
    %v527 = vunpack.c.l.b16 %v378
    %v528 = vunpack.c.l.b16 %v379
    %v529 = vunpack.c.l.b16 %v380
    %v530 = vunpack.c.l.b16 %v381
    %v531 = vunpack.c.l.b16 %v382
    %v532 = vunpack.c.l.b16 %v383
    %v533 = vunpack.c.l.b16 %v384
    %v534 = vunpack.c.l.b16 %v385
    %v535 = vunpack.c.l.b16 %v386
    %v536 = vpack.c.b16 %v489, %v488
    %v537 = vpack.c.b16 %v491, %v490
    %v538 = vpack.c.b16 %v493, %v492
    %v539 = vpack.c.b16 %v495, %v494
    %v540 = vpack.c.b16 %v497, %v496
    %v541 = vpack.c.b16 %v499, %v498
    %v542 = vpack.c.b16 %v501, %v500
    %v543 = vpack.c.b16 %v503, %v502
    %v544 = vpack.c.b16 %v505, %v504
    %v545 = vpack.c.b16 %v507, %v506
    %v546 = vpack.c.b16 %v509, %v508
    %v547 = vpack.c.b16 %v511, %v510
    %v548 = vpack.c.b16 %v513, %v512
    %v549 = vpack.c.b16 %v515, %v514
    %v550 = vpack.c.b16 %v517, %v516
    %v551 = vpack.c.b16 %v519, %v518
    %v552 = vpack.c.b16 %v521, %v520
    %v553 = vpack.c.b16 %v523, %v522
    %v554 = vpack.c.b16 %v525, %v524
    %v555 = vpack.c.b16 %v527, %v526
    %v556 = vpack.c.b16 %v529, %v528
    %v557 = vpack.c.b16 %v531, %v530
    %v558 = vpack.c.b16 %v533, %v532
    %v559 = vpack.c.b16 %v535, %v534
    %584 = vmatpush.bf16.msra.mxu0 %v543
    %585 = vmatpush.bf16.msra.mxu0 %v542
    %586 = vmatpush.bf16.msra.mxu0 %v541
    %587 = vmatpush.bf16.msra.mxu0 %v540
    %588 = vmatpush.bf16.msra.mxu0 %v539
    %589 = vmatpush.bf16.msra.mxu0 %v538
    %590 = vmatpush.bf16.msra.mxu0 %v537
    %591 = vmatpush.bf16.msra.mxu0 %v536
    %592 = vmatmul.bf16.gmra.mxu0 %v431
    %v593 = vpop.f32.mrf.mxu0
    %v594 = vadd.f32 %v438, %v593
    %v595 = vpop.f32.mrf.mxu0
    %v596 = vadd.f32 %v438, %v595
    %597 = vmatmul.bf16.gmra.mxu0 %v434
    %v598 = vpop.f32.mrf.mxu0
    %v599 = vadd.f32 %v438, %v598
    %v600 = vpop.f32.mrf.mxu0
    %601 = vdwg.mxu0
    %602 = vmatpush.bf16.msra.mxu0 %v551
    %603 = vmatpush.bf16.msra.mxu0 %v550
    %604 = vmatpush.bf16.msra.mxu0 %v549
    %605 = vmatpush.bf16.msra.mxu0 %v548
    %606 = vmatpush.bf16.msra.mxu0 %v547
    %607 = vmatpush.bf16.msra.mxu0 %v546
    %608 = vmatpush.bf16.msra.mxu0 %v545
    %609 = vmatpush.bf16.msra.mxu0 %v544
    %610 = vmatmul.bf16.gmra.mxu0 %v432
    %v611 = vpop.f32.mrf.mxu0
    %v612 = vadd.f32 %v594, %v611
    %v613 = vpop.f32.mrf.mxu0
    %v614 = vadd.f32 %v596, %v613
    %615 = vmatmul.bf16.gmra.mxu0 %v435
    %v616 = vpop.f32.mrf.mxu0
    %v617 = vadd.f32 %v599, %v616
    %v618 = vpop.f32.mrf.mxu0
    %619 = vdwg.mxu0
    %620 = vmatpush.bf16.msra.mxu0 %v559
    %621 = vmatpush.bf16.msra.mxu0 %v558
    %622 = vmatpush.bf16.msra.mxu0 %v557
    %623 = vmatpush.bf16.msra.mxu0 %v556
    %624 = vmatpush.bf16.msra.mxu0 %v555
    %625 = vmatpush.bf16.msra.mxu0 %v554
    %626 = vmatpush.bf16.msra.mxu0 %v553
    %627 = vmatpush.bf16.msra.mxu0 %v552
    %628 = vmatmul.bf16.gmra.mxu0 %v433
    %v629 = vpop.f32.mrf.mxu0
    %v630 = vadd.f32 %v612, %v629
    %v631 = vpop.f32.mrf.mxu0
    %v632 = vadd.f32 %v614, %v631
    %633 = vmatmul.bf16.gmra.mxu0 %v436
    %v634 = vpop.f32.mrf.mxu0
    %v635 = vadd.f32 %v617, %v634
    %v636 = vpop.f32.mrf.mxu0
    %637 = vdwg.mxu0
    %v638 = vmax.f32 %v630, 0.0
    %v639 = vmax.f32 %v632, 0.0
    %v640 = vmax.f32 %v635, 0.0
    %s641 = scalar_lea.vmem [#allocation2], 384
    %v642 = vld [vmem:[%s641] sm:$0xf]
    %v643 = vld [vmem:[%s641 + $0x4] sm:$0xf]
    %v644 = vld [vmem:[%s641 + $0x8] sm:$0xf]
    %v645 = vld [vmem:[%s641 + $0xc] sm:$0xf]
    %v646 = vld [vmem:[%s641 + $0x10] sm:$0xf]
    %v647 = vld [vmem:[%s641 + $0x14] sm:$0xf]
    %v648 = vld [vmem:[%s641 + $0x18] sm:$0xf]
    %v649 = vld [vmem:[%s641 + $0x1c] sm:$0xf]
    %v650 = vld [vmem:[%s641 + $0x20] sm:$0xf]
    %v651 = vld [vmem:[%s641 + $0x24] sm:$0xf]
    %v652 = vld [vmem:[%s641 + $0x28] sm:$0xf]
    %v653 = vld [vmem:[%s641 + $0x2c] sm:$0xf]
    %v654 = vld [vmem:[%s641 + $0x30] sm:$0xf]
    %v655 = vld [vmem:[%s641 + $0x34] sm:$0xf]
    %v656 = vld [vmem:[%s641 + $0x38] sm:$0xf]
    %v657 = vld [vmem:[%s641 + $0x3c] sm:$0xf]
    %v658 = vld [vmem:[%s641 + $0x40] sm:$0xf]
    %v659 = vld [vmem:[%s641 + $0x44] sm:$0xf]
    %v660 = vld [vmem:[%s641 + $0x48] sm:$0xf]
    %v661 = vld [vmem:[%s641 + $0x4c] sm:$0xf]
    %v662 = vld [vmem:[%s641 + $0x50] sm:$0xf]
    %v663 = vld [vmem:[%s641 + $0x54] sm:$0xf]
    %v664 = vld [vmem:[%s641 + $0x58] sm:$0xf]
    %v665 = vld [vmem:[%s641 + $0x5c] sm:$0xf]
    %v666 = vld [vmem:[%s641 + $0x60] sm:$0xf]
    %v667 = vld [vmem:[%s641 + $0x64] sm:$0xf]
    %v668 = vld [vmem:[%s641 + $0x68] sm:$0xf]
    %v669 = vld [vmem:[%s641 + $0x6c] sm:$0xf]
    %v670 = vld [vmem:[%s641 + $0x70] sm:$0xf]
    %v671 = vld [vmem:[%s641 + $0x74] sm:$0xf]
    %v672 = vld [vmem:[%s641 + $0x78] sm:$0xf]
    %v673 = vld [vmem:[%s641 + $0x7c] sm:$0xf]
    %v674 = vld [vmem:[%s641 + $0x80] sm:$0xf]
    %v675 = vld [vmem:[%s641 + $0x84] sm:$0xf]
    %v676 = vld [vmem:[%s641 + $0x88] sm:$0xf]
    %v677 = vld [vmem:[%s641 + $0x8c] sm:$0xf]
    %v678 = vld [vmem:[%s641 + $0x90] sm:$0xf]
    %v679 = vld [vmem:[%s641 + $0x94] sm:$0xf]
    %v680 = vld [vmem:[%s641 + $0x98] sm:$0xf]
    %v681 = vld [vmem:[%s641 + $0x9c] sm:$0xf]
    %v682 = vld [vmem:[%s641 + $0xa0] sm:$0xf]
    %v683 = vld [vmem:[%s641 + $0xa4] sm:$0xf]
    %v684 = vld [vmem:[%s641 + $0xa8] sm:$0xf]
    %v685 = vld [vmem:[%s641 + $0xac] sm:$0xf]
    %v686 = vld [vmem:[%s641 + $0xb0] sm:$0xf]
    %v687 = vld [vmem:[%s641 + $0xb4] sm:$0xf]
    %v688 = vld [vmem:[%s641 + $0xb8] sm:$0xf]
    %v689 = vld [vmem:[%s641 + $0xbc] sm:$0xf]
    %s690 = scalar_lea.vmem %s2, 2
    %v691 = vld [vmem:[%s690] sm:$0x1]
    %v694 = vrot.slane %v638, 1
    %v695 = vrot.slane %v639, 1
    %v696 = vsel %vm86, %v694, %v695
    %v699 = vrot.slane %v638, 2
    %v700 = vrot.slane %v639, 2
    %v701 = vsel %vm92, %v699, %v700
    %v705 = vrot.slane %v640, 1
    %v706 = vsel %vm86, %v695, %v705
    %v707 = vrot.slane %v640, 2
    %v708 = vsel %vm92, %v700, %v707
    %v709 = vrot.slane %v706, 2
    %v710 = vrot.slane %v705, 2
    %v711 = vsel %vm92, %v709, %v710
    %v712 = vrot.slane %v708, 2
    %v713 = vrot.slane %v707, 2
    %v714 = vsel %vm92, %v712, %v713
    %vm721 = vcmask 1041408
    %v722 = vsel %vm721, %v639, %v708
    %v723 = vsel %vm721, %v695, %v711
    %v724 = vsel %vm721, %v700, %v714
    %v725 = vpack.c.bf16 %v722, %v638
    %v726 = vpack.c.bf16 %v723, %v696
    %v727 = vpack.c.bf16 %v724, %v701
    %v728 = vpack.c.bf16 %v707, %v707
    %v729 = vpack.c.bf16 %v710, %v710
    %v730 = vpack.c.bf16 %v713, %v713
    %v732 = vperm.slane %v691, 0
    %v782 = vunpack.c.l.b16 %v642
    %v783 = vunpack.c.l.b16 %v643
    %v784 = vunpack.c.l.b16 %v644
    %v785 = vunpack.c.l.b16 %v645
    %v786 = vunpack.c.l.b16 %v646
    %v787 = vunpack.c.l.b16 %v647
    %v788 = vunpack.c.l.b16 %v648
    %v789 = vunpack.c.l.b16 %v649
    %v790 = vunpack.c.l.b16 %v650
    %v791 = vunpack.c.l.b16 %v651
    %v792 = vunpack.c.l.b16 %v652
    %v793 = vunpack.c.l.b16 %v653
    %v794 = vunpack.c.l.b16 %v654
    %v795 = vunpack.c.l.b16 %v655
    %v796 = vunpack.c.l.b16 %v656
    %v797 = vunpack.c.l.b16 %v657
    %v798 = vunpack.c.l.b16 %v658
    %v799 = vunpack.c.l.b16 %v659
    %v800 = vunpack.c.l.b16 %v660
    %v801 = vunpack.c.l.b16 %v661
    %v802 = vunpack.c.l.b16 %v662
    %v803 = vunpack.c.l.b16 %v663
    %v804 = vunpack.c.l.b16 %v664
    %v805 = vunpack.c.l.b16 %v665
    %v806 = vunpack.c.l.b16 %v666
    %v807 = vunpack.c.l.b16 %v667
    %v808 = vunpack.c.l.b16 %v668
    %v809 = vunpack.c.l.b16 %v669
    %v810 = vunpack.c.l.b16 %v670
    %v811 = vunpack.c.l.b16 %v671
    %v812 = vunpack.c.l.b16 %v672
    %v813 = vunpack.c.l.b16 %v673
    %v814 = vunpack.c.l.b16 %v674
    %v815 = vunpack.c.l.b16 %v675
    %v816 = vunpack.c.l.b16 %v676
    %v817 = vunpack.c.l.b16 %v677
    %v818 = vunpack.c.l.b16 %v678
    %v819 = vunpack.c.l.b16 %v679
    %v820 = vunpack.c.l.b16 %v680
    %v821 = vunpack.c.l.b16 %v681
    %v822 = vunpack.c.l.b16 %v682
    %v823 = vunpack.c.l.b16 %v683
    %v824 = vunpack.c.l.b16 %v684
    %v825 = vunpack.c.l.b16 %v685
    %v826 = vunpack.c.l.b16 %v686
    %v827 = vunpack.c.l.b16 %v687
    %v828 = vunpack.c.l.b16 %v688
    %v829 = vunpack.c.l.b16 %v689
    %v830 = vpack.c.b16 %v783, %v782
    %v831 = vpack.c.b16 %v785, %v784
    %v832 = vpack.c.b16 %v787, %v786
    %v833 = vpack.c.b16 %v789, %v788
    %v834 = vpack.c.b16 %v791, %v790
    %v835 = vpack.c.b16 %v793, %v792
    %v836 = vpack.c.b16 %v795, %v794
    %v837 = vpack.c.b16 %v797, %v796
    %v838 = vpack.c.b16 %v799, %v798
    %v839 = vpack.c.b16 %v801, %v800
    %v840 = vpack.c.b16 %v803, %v802
    %v841 = vpack.c.b16 %v805, %v804
    %v842 = vpack.c.b16 %v807, %v806
    %v843 = vpack.c.b16 %v809, %v808
    %v844 = vpack.c.b16 %v811, %v810
    %v845 = vpack.c.b16 %v813, %v812
    %v846 = vpack.c.b16 %v815, %v814
    %v847 = vpack.c.b16 %v817, %v816
    %v848 = vpack.c.b16 %v819, %v818
    %v849 = vpack.c.b16 %v821, %v820
    %v850 = vpack.c.b16 %v823, %v822
    %v851 = vpack.c.b16 %v825, %v824
    %v852 = vpack.c.b16 %v827, %v826
    %v853 = vpack.c.b16 %v829, %v828
    %878 = vmatpush.bf16.msra.mxu0 %v837
    %879 = vmatpush.bf16.msra.mxu0 %v836
    %880 = vmatpush.bf16.msra.mxu0 %v835
    %881 = vmatpush.bf16.msra.mxu0 %v834
    %882 = vmatpush.bf16.msra.mxu0 %v833
    %883 = vmatpush.bf16.msra.mxu0 %v832
    %884 = vmatpush.bf16.msra.mxu0 %v831
    %885 = vmatpush.bf16.msra.mxu0 %v830
    %886 = vmatmul.bf16.gmra.mxu0 %v725
    %v887 = vpop.f32.mrf.mxu0
    %v888 = vadd.f32 %v732, %v887
    %v889 = vpop.f32.mrf.mxu0
    %v890 = vadd.f32 %v732, %v889
    %891 = vmatmul.bf16.gmra.mxu0 %v728
    %v892 = vpop.f32.mrf.mxu0
    %v893 = vadd.f32 %v732, %v892
    %v894 = vpop.f32.mrf.mxu0
    %895 = vdwg.mxu0
    %896 = vmatpush.bf16.msra.mxu0 %v845
    %897 = vmatpush.bf16.msra.mxu0 %v844
    %898 = vmatpush.bf16.msra.mxu0 %v843
    %899 = vmatpush.bf16.msra.mxu0 %v842
    %900 = vmatpush.bf16.msra.mxu0 %v841
    %901 = vmatpush.bf16.msra.mxu0 %v840
    %902 = vmatpush.bf16.msra.mxu0 %v839
    %903 = vmatpush.bf16.msra.mxu0 %v838
    %904 = vmatmul.bf16.gmra.mxu0 %v726
    %v905 = vpop.f32.mrf.mxu0
    %v906 = vadd.f32 %v888, %v905
    %v907 = vpop.f32.mrf.mxu0
    %v908 = vadd.f32 %v890, %v907
    %909 = vmatmul.bf16.gmra.mxu0 %v729
    %v910 = vpop.f32.mrf.mxu0
    %v911 = vadd.f32 %v893, %v910
    %v912 = vpop.f32.mrf.mxu0
    %913 = vdwg.mxu0
    %914 = vmatpush.bf16.msra.mxu0 %v853
    %915 = vmatpush.bf16.msra.mxu0 %v852
    %916 = vmatpush.bf16.msra.mxu0 %v851
    %917 = vmatpush.bf16.msra.mxu0 %v850
    %918 = vmatpush.bf16.msra.mxu0 %v849
    %919 = vmatpush.bf16.msra.mxu0 %v848
    %920 = vmatpush.bf16.msra.mxu0 %v847
    %921 = vmatpush.bf16.msra.mxu0 %v846
    %922 = vmatmul.bf16.gmra.mxu0 %v727
    %v923 = vpop.f32.mrf.mxu0
    %v924 = vadd.f32 %v906, %v923
    %v925 = vpop.f32.mrf.mxu0
    %v926 = vadd.f32 %v908, %v925
    %927 = vmatmul.bf16.gmra.mxu0 %v730
    %v928 = vpop.f32.mrf.mxu0
    %v929 = vadd.f32 %v911, %v928
    %v930 = vpop.f32.mrf.mxu0
    %931 = vdwg.mxu0
    %v932 = vmax.f32 %v924, 0.0
    %v933 = vmax.f32 %v926, 0.0
    %v934 = vmax.f32 %v929, 0.0
    %935 = vst [vmem:[%s3] sm:$0xff] %v932
    %936 = vst [vmem:[%s3 + $0x8] sm:$0x3] %v933
    %s937 = scalar_lea.vmem %s3, 16
    %938 = vst [vmem:[%s937 - $0x2] sm:$0xfc] %v933
    %939 = vst [vmem:[%s937 + $0x6] sm:$0xf] %v934
    // Predicated region
    $region18: #{embedding_forward.1} parent=1 // pred_check
      _
    $region19: #{embedding_forward.1} parent=1 // pred_check_branch
      %941 = sbr.rel (0) target = $region21
    $region20: #{embedding_forward.1} parent=1 // pred_region
      _
    $region21: #{embedding_forward.1} parent=1 // pred_fallthru
      _
    // Predicated region
    $region22: #{embedding_forward.1} parent=1 // pred_check
      _
    $region23: #{embedding_forward.1} parent=1 // pred_check_branch
      %943 = sbr.rel (0) target = $region25
    $region24: #{embedding_forward.1} parent=1 // pred_region
      _
    $region25: #{embedding_forward.1} parent=1 // pred_fallthru
      _
    %944 = vsyncpa [#allocation3], 1

</llo_original>
